<compile_context>
chip_gen: v5e
topology: v5e:2x2
jax: 0.10.0
libtpu: 0.0.40
codegen_flags: <defaults>
</compile_context>

<pallas_src>
import functools

import jax
import jax.numpy as jnp
import numpy as np
from jax import lax
from jax.experimental import pallas as pl
from jax.experimental.pallas import tpu as pltpu

EPS = 1e-5


# --------------------------------------------------------------------------
# One-time host-side parameter / geometry preprocessing (cacheable at init).
# --------------------------------------------------------------------------

def _col_weight_stacked(w_hwio, w_in, w_out, stride, pad):
    """Stacked banded matrices vstack(B_0,B_1,B_2): (3*W*Cin, Wo*Cout).
    Block dy carries the three horizontal taps w[dy, dx]; missing bands are
    the left/right zero padding."""
    _, _, cin, cout = w_hwio.shape
    w_np = np.asarray(w_hwio, np.float32)
    blocks = []
    for dy in range(3):
        acc = np.zeros((w_in * cin, w_out * cout), np.float32)
        for dx in range(3):
            place = np.zeros((w_in, w_out), np.float32)
            for j in range(w_out):
                ww = j * stride + dx - pad
                if 0 <= ww < w_in:
                    place[ww, j] = 1.0
            acc += np.kron(place, w_np[dy, dx])
        blocks.append(acc)
    return np.concatenate(blocks, axis=0)


def _row_select_stacked(n, h_in, h_out, stride, pad):
    """Stacked 0/1 row-selection matrix (strided fallback): (3*N*Ho, N*H)."""
    s = np.zeros((3 * n * h_out, n * h_in), np.float32)
    for dy in range(3):
        for b in range(n):
            for i in range(h_out):
                hh = i * stride + dy - pad
                if 0 <= hh < h_in:
                    s[dy * n * h_out + b * h_out + i, b * h_in + hh] = 1.0
    return s


def _vert_masks(n, h, width):
    """Row masks for roll-based vertical taps (stride 1, pad 1): zero the rows
    where the circular sublane roll wraps across top/bottom padding or a batch
    boundary.  dy=1 needs no mask (identity)."""
    m0 = np.ones((n * h, width), np.float32)     # dy = 0 reads row i-1
    m2 = np.ones((n * h, width), np.float32)     # dy = 2 reads row i+1
    for b in range(n):
        m0[b * h, :] = 0.0
        m2[b * h + h - 1, :] = 0.0
    return m0, m2


def _channel_proj(w_spatial, c):
    """P[i, j] = [i % C == j % C]: a single lane-dense matmul that collapses a
    slab column-sum to per-channel sums AND rebroadcasts to slab layout."""
    idx = np.arange(w_spatial * c) % c
    return (idx[:, None] == idx[None, :]).astype(np.float32)


def _tile_channels(vec, w_spatial):
    """Per-channel vector -> (1, W*C) slab lane layout."""
    return np.tile(np.asarray(vec, np.float32), w_spatial)[None, :]


def _pack_blocks(named_blocks):
    """Coalesce same-lane-width constants into ONE array (single DMA).  Each
    block's row count is padded to a multiple of 8 so every in-kernel static
    slice is sublane-aligned.  Returns (packed jnp array, {name: (off, rows)})."""
    width = named_blocks[0][1].shape[1]
    parts, offs, off = [], {}, 0
    for name, arr in named_blocks:
        arr = np.asarray(arr, np.float32)
        assert arr.ndim == 2 and arr.shape[1] == width
        nrows = arr.shape[0]
        padr = (-nrows) % 8
        if padr:
            arr = np.concatenate([arr, np.zeros((padr, width), np.float32)], 0)
        offs[name] = (off, nrows)
        parts.append(arr)
        off += arr.shape[0]
    return jnp.asarray(np.concatenate(parts, axis=0)), offs


def precompute(params, n, h, w, stride, padding):
    cin, cout = params["w1"].shape[2], params["w1"].shape[3]
    ho = (h + 2 * padding - 3) // stride + 1
    wo = (w + 2 * padding - 3) // stride + 1
    hs = (h + 2 - 3) // stride + 1
    ws = (w + 2 - 3) // stride + 1
    assert (ho, wo) == (hs, ws), "conv_block / conv_skip output shapes must match"

    roll_main = (stride == 1)            # conv1 / conv_skip vertical taps via roll
    if roll_main:
        assert padding == 1 and ho == h and wo == w

    # -------- input-side constants (lane width = W*Cin) --------
    in_blocks = [
        ("p_in", _channel_proj(w, cin)),
        ("bn1_g", _tile_channels(params["bn1_g"], w)),
        ("bn1_b", _tile_channels(params["bn1_b"], w)),
    ]
    if roll_main:
        m0, m2 = _vert_masks(n, h, w * cin)
        in_blocks += [("mask0_in", m0), ("mask2_in", m2)]

    # -------- output-side constants (lane width = Wo*Cout) --------
    m0_mid, m2_mid = _vert_masks(n, ho, wo * cout)
    out_blocks = [
        ("b1s", _col_weight_stacked(params["w1"], w, wo, stride, padding)),
        ("b2s", _col_weight_stacked(params["w2"], wo, wo, 1, 1)),
        ("b3s", _col_weight_stacked(params["w3"], w, wo, stride, 1)),
        ("p_out", _channel_proj(wo, cout)),
        ("bn2_g", _tile_channels(params["bn2_g"], wo)),
        ("bn2_b", _tile_channels(params["bn2_b"], wo)),
        ("bn3_g", _tile_channels(params["bn3_g"], wo)),
        ("bn3_b", _tile_channels(params["bn3_b"], wo)),
        # conv2 bias pre-tiled to slab lanes; conv1/conv_skip biases dropped
        # (exactly cancelled by the following batch-statistics BatchNorm).
        ("bias2", _tile_channels(params["b2"], wo)),
        ("mask0_mid", m0_mid),
        ("mask2_mid", m2_mid),
    ]

    c_in, offs_in = _pack_blocks(in_blocks)
    c_out, offs_out = _pack_blocks(out_blocks)

    extra = []
    if not roll_main:   # strided fallback: stacked row-selection matrices
        extra = [jnp.asarray(_row_select_stacked(n, h, ho, stride, padding)),
                 jnp.asarray(_row_select_stacked(n, h, ho, stride, 1))]

    dims = dict(n=n, h=h, w=w, cin=cin, cout=cout, ho=ho, wo=wo,
                roll_main=roll_main)
    return c_in, c_out, extra, offs_in, offs_out, dims


# ------------------------------ fused forward --------------------------------

def build_forward(params, n, h, w, stride, padding):
    c_in, c_out, extra, offs_in, offs_out, dims = precompute(
        params, n, h, w, stride, padding)
    cin, cout, ho, wo = dims["cin"], dims["cout"], dims["ho"], dims["wo"]
    roll_main = dims["roll_main"]
    cnt_in, cnt_out = float(n * h * w), float(n * ho * wo)
    nho = n * ho

    def kernel(*refs):
        if roll_main:
            x_ref, cin_ref, cout_ref, o_ref = refs
            s1 = s3 = None
        else:
            x_ref, cin_ref, cout_ref, s1_ref, s3_ref, o_ref = refs
            s1, s3 = s1_ref[...], s3_ref[...]

        def blk(ref, offs, name):                       # static, 8-aligned slice
            off, nr = offs[name]
            return ref[off:off + nr, :]

        bin_ = functools.partial(blk, cin_ref, offs_in)
        bout = functools.partial(blk, cout_ref, offs_out)

        def bn_scale_shift(v, p, g, b, count):
            # Training-mode BatchNorm (biased batch var, two-pass), fully
            # lane-dense: colsum @ P collapses + rebroadcasts per channel.
            inv = 1.0 / count
            mean = jnp.dot(jnp.sum(v, axis=0, keepdims=True), p,
                           preferred_element_type=jnp.float32) * inv
            cen = v - mean
            var = jnp.dot(jnp.sum(cen * cen, axis=0, keepdims=True), p,
                          preferred_element_type=jnp.float32) * inv
            scale = g * lax.rsqrt(var + EPS)
            return scale, b - mean * scale

        def conv_roll(v, m0, m2, b_stacked):
            # stride-1 / pad-1 3x3 conv: vertical taps = sublane rolls (XLU)
            # * padding masks (VPU); horizontal taps + channel mix = one
            # K = 3*W*C matmul against the stacked banded weights.
            r = v.shape[0]
            t0 = pltpu.roll(v, shift=1 % r, axis=0) * m0          # dy = 0
            t2 = pltpu.roll(v, shift=(r - 1) % r, axis=0) * m2    # dy = 2
            cat = jnp.concatenate([t0, v, t2], axis=1)
            return jnp.dot(cat, b_stacked, preferred_element_type=jnp.float32)

        def conv_smat(v, s_stacked, b_stacked):
            # Strided conv fallback: one stacked row-selection matmul, then
            # the same fused horizontal-tap matmul.
            sv = jnp.dot(s_stacked, v, preferred_element_type=jnp.float32)
            cat = jnp.concatenate(
                [sv[0:nho], sv[nho:2 * nho], sv[2 * nho:3 * nho]], axis=1)
            return jnp.dot(cat, b_stacked, preferred_element_type=jnp.float32)

        x = x_ref[...]                                  # (N*H, W*Cin)

        # ---- conv_block: BN1 (batch stats) -> ReLU ----
        sc, sh = bn_scale_shift(x, bin_("p_in"), bin_("bn1_g"), bin_("bn1_b"),
                                cnt_in)
        y0 = jnp.maximum(x * sc + sh, 0.0)

        # ---- Conv1 (3x3, stride, padding); bias cancelled by BN2 ----
        if roll_main:
            y1 = conv_roll(y0, bin_("mask0_in"), bin_("mask2_in"), bout("b1s"))
        else:
            y1 = conv_smat(y0, s1, bout("b1s"))

        # ---- BN2 -> ReLU ----
        sc, sh = bn_scale_shift(y1, bout("p_out"), bout("bn2_g"), bout("bn2_b"),
                                cnt_out)
        y2 = jnp.maximum(y1 * sc + sh, 0.0)

        # ---- Conv2 (3x3, stride 1, pad 1) + bias (kept: no BN follows) ----
        y3 = conv_roll(y2, bout("mask0_mid"), bout("mask2_mid"),
                       bout("b2s")) + bout("bias2")

        # ---- conv_skip: Conv3 (stride, pad 1, bias cancelled) + BN3,
        #      fused with the residual add ----
        if roll_main:
            z1 = conv_roll(x, bin_("mask0_in"), bin_("mask2_in"), bout("b3s"))
        else:
            z1 = conv_smat(x, s3, bout("b3s"))
        sc, sh = bn_scale_shift(z1, bout("p_out"), bout("bn3_g"), bout("bn3_b"),
                                cnt_out)

        o_ref[...] = y3 + z1 * sc + sh                  # (N*Ho, Wo*Cout)

    call = pl.pallas_call(
        kernel,
        out_shape=jax.ShapeDtypeStruct((n * ho, wo * cout), jnp.float32),
        compiler_params=pltpu.CompilerParams(vmem_limit_bytes=32 * 1024 * 1024),
    )

    def forward(x_nchw):
        # NCHW -> lane-dense slab (N*H, W*Cin): pure layout glue around the
        # single fused kernel (kept outside; 16/32 KB at this size).
        x_slab = (jnp.transpose(x_nchw, (0, 2, 3, 1))
                  .astype(jnp.float32).reshape(n * h, w * cin))
        out_slab = call(x_slab, c_in, c_out, *extra)
        return jnp.transpose(out_slab.reshape(n, ho, wo, cout), (0, 3, 1, 2))

    return jax.jit(forward)


# ------------------------------ pure-JAX reference ---------------------------

def reference_forward(x_nchw, p, stride, padding):
    x = jnp.transpose(x_nchw, (0, 2, 3, 1)).astype(jnp.float32)

    def bn(t, g, b):
        mu = t.mean(axis=(0, 1, 2))
        var = t.var(axis=(0, 1, 2))
        return (t - mu) / jnp.sqrt(var + EPS) * g + b

    def conv(t, w, bias, s, pd):
        return lax.conv_general_dilated(
            t, w, (s, s), [(pd, pd), (pd, pd)],
            dimension_numbers=("NHWC", "HWIO", "NHWC")) + bias

    y = jax.nn.relu(bn(x, p["bn1_g"], p["bn1_b"]))
    y = conv(y, p["w1"], p["b1"], stride, padding)
    y = jax.nn.relu(bn(y, p["bn2_g"], p["bn2_b"]))
    y = conv(y, p["w2"], p["b2"], 1, 1)
    z = conv(x, p["w3"], p["b3"], stride, 1)
    z = bn(z, p["bn3_g"], p["bn3_b"])
    return jnp.transpose(y + z, (0, 3, 1, 2))


# ----------------------------------- main ------------------------------------

def init_params(key, cin, cout):
    ks = jax.random.split(key, 12)
    f32 = jnp.float32
    return {
        # conv weights in HWIO layout (3,3,Cin,Cout); biases per output channel
        "w1": 0.1 * jax.random.normal(ks[0], (3, 3, cin, cout), f32),
        "b1": 0.05 * jax.random.normal(ks[1], (cout,), f32),
        "w2": 0.1 * jax.random.normal(ks[2], (3, 3, cout, cout), f32),
        "b2": 0.05 * jax.random.normal(ks[3], (cout,), f32),
        "w3": 0.1 * jax.random.normal(ks[4], (3, 3, cin, cout), f32),
        "b3": 0.05 * jax.random.normal(ks[5], (cout,), f32),
        # BatchNorm affine params (gamma, beta)
        "bn1_g": 1.0 + 0.1 * jax.random.normal(ks[6], (cin,), f32),
        "bn1_b": 0.1 * jax.random.normal(ks[7], (cin,), f32),
        "bn2_g": 1.0 + 0.1 * jax.random.normal(ks[8], (cout,), f32),
        "bn2_b": 0.1 * jax.random.normal(ks[9], (cout,), f32),
        "bn3_g": 1.0 + 0.1 * jax.random.normal(ks[10], (cout,), f32),
        "bn3_b": 0.1 * jax.random.normal(ks[11], (cout,), f32),
    }


if __name__ == "__main__":
    key = jax.random.PRNGKey(0)
    kx, kp = jax.random.split(key)

    N, Cin, H, W = 2, 4, 16, 16          # x: [2, 4, 16, 16] (NCHW, like PyTorch)
    Cout = 8
    stride, padding = 1, 1

    x = jax.random.normal(kx, (N, Cin, H, W), jnp.float32)
    params = init_params(kp, Cin, Cout)

    fwd = build_forward(params, N, H, W, stride, padding)
    out = fwd(x)
    jax.block_until_ready(out)

    ref = reference_forward(x, params, stride, padding)
    np.testing.assert_allclose(np.asarray(out), np.asarray(ref),
                               rtol=2e-4, atol=2e-4)
    print("KERNEL_OK")
</pallas_src>

<mosaic_0001>
module attributes {stable_mosaic.version = 11 : i64} {
  func.func @kernel(%arg0: memref<32x64xf32, #tpu.memory_space<vmem>>, %arg1: memref<144x64xf32, #tpu.memory_space<vmem>>, %arg2: memref<1000x128xf32, #tpu.memory_space<vmem>>, %arg3: memref<32x128xf32, #tpu.memory_space<vmem>>) attributes {dimension_semantics = [], scalar_prefetch = 0 : i64, scratch_operands = 0 : i64, tpu.core_type = #tpu.core_type<tc>} {
    %c0 = arith.constant 0 : index
    %c0_0 = arith.constant 0 : index
    %0 = vector.load %arg0[%c0, %c0_0] : memref<32x64xf32, #tpu.memory_space<vmem>>, vector<32x64xf32>
    %c0_1 = arith.constant 0 : index
    %c0_2 = arith.constant 0 : index
    %1 = vector.load %arg1[%c0_1, %c0_2] : memref<144x64xf32, #tpu.memory_space<vmem>>, vector<64x64xf32>
    %c64 = arith.constant 64 : index
    %c0_3 = arith.constant 0 : index
    %2 = vector.load %arg1[%c64, %c0_3] : memref<144x64xf32, #tpu.memory_space<vmem>>, vector<1x64xf32>
    %c72 = arith.constant 72 : index
    %c0_4 = arith.constant 0 : index
    %3 = vector.load %arg1[%c72, %c0_4] : memref<144x64xf32, #tpu.memory_space<vmem>>, vector<1x64xf32>
    %cst = arith.constant dense<0.000000e+00> : vector<64xf32>
    %4 = vector.multi_reduction <add>, %0, %cst [0] : vector<32x64xf32> to vector<64xf32>
    %5 = vector.shape_cast %4 : vector<64xf32> to vector<1x64xf32>
    %cst_5 = arith.constant dense<0.000000e+00> : vector<1x64xf32>
    %6 = tpu.matmul %5, %1, %cst_5 {dimension_numbers = #tpu.dot_dimension_numbers<[1], [0], [0], [1], [0, 0, 1, 1], [], []>} : vector<1x64xf32>, vector<64x64xf32>, vector<1x64xf32> -> vector<1x64xf32>
    %cst_6 = arith.constant 0.001953125 : f32
    %7 = vector.broadcast %cst_6 : f32 to vector<1x64xf32>
    %8 = arith.mulf %6, %7 : vector<1x64xf32>
    %9 = vector.broadcast %8 : vector<1x64xf32> to vector<32x64xf32>
    %10 = arith.subf %0, %9 : vector<32x64xf32>
    %11 = arith.mulf %10, %10 : vector<32x64xf32>
    %cst_7 = arith.constant dense<0.000000e+00> : vector<64xf32>
    %12 = vector.multi_reduction <add>, %11, %cst_7 [0] : vector<32x64xf32> to vector<64xf32>
    %13 = vector.shape_cast %12 : vector<64xf32> to vector<1x64xf32>
    %cst_8 = arith.constant dense<0.000000e+00> : vector<1x64xf32>
    %14 = tpu.matmul %13, %1, %cst_8 {dimension_numbers = #tpu.dot_dimension_numbers<[1], [0], [0], [1], [0, 0, 1, 1], [], []>} : vector<1x64xf32>, vector<64x64xf32>, vector<1x64xf32> -> vector<1x64xf32>
    %cst_9 = arith.constant 0.001953125 : f32
    %15 = vector.broadcast %cst_9 : f32 to vector<1x64xf32>
    %16 = arith.mulf %14, %15 : vector<1x64xf32>
    %cst_10 = arith.constant 9.99999974E-6 : f32
    %17 = vector.broadcast %cst_10 : f32 to vector<1x64xf32>
    %18 = arith.addf %16, %17 : vector<1x64xf32>
    %19 = math.rsqrt %18 : vector<1x64xf32>
    %20 = arith.mulf %2, %19 : vector<1x64xf32>
    %21 = arith.mulf %8, %20 : vector<1x64xf32>
    %22 = arith.subf %3, %21 : vector<1x64xf32>
    %23 = vector.broadcast %20 : vector<1x64xf32> to vector<32x64xf32>
    %24 = arith.mulf %0, %23 : vector<32x64xf32>
    %25 = vector.broadcast %22 : vector<1x64xf32> to vector<32x64xf32>
    %26 = arith.addf %24, %25 : vector<32x64xf32>
    %cst_11 = arith.constant 0.000000e+00 : f32
    %27 = vector.broadcast %cst_11 : f32 to vector<32x64xf32>
    %28 = arith.maximumf %26, %27 : vector<32x64xf32>
    %c80 = arith.constant 80 : index
    %c0_12 = arith.constant 0 : index
    %29 = vector.load %arg1[%c80, %c0_12] : memref<144x64xf32, #tpu.memory_space<vmem>>, vector<32x64xf32>
    %c112 = arith.constant 112 : index
    %c0_13 = arith.constant 0 : index
    %30 = vector.load %arg1[%c112, %c0_13] : memref<144x64xf32, #tpu.memory_space<vmem>>, vector<32x64xf32>
    %c0_14 = arith.constant 0 : index
    %c0_15 = arith.constant 0 : index
    %31 = vector.load %arg2[%c0_14, %c0_15] : memref<1000x128xf32, #tpu.memory_space<vmem>>, vector<192x128xf32>
    %c1_i32 = arith.constant 1 : i32
    %32 = tpu.dynamic_rotate %28 by %c1_i32 dim 0 : vector<32x64xf32>, i32 -> vector<32x64xf32>
    %33 = arith.mulf %32, %29 : vector<32x64xf32>
    %c31_i32 = arith.constant 31 : i32
    %34 = tpu.dynamic_rotate %28 by %c31_i32 dim 0 : vector<32x64xf32>, i32 -> vector<32x64xf32>
    %35 = arith.mulf %34, %30 : vector<32x64xf32>
    %36 = tpu.concatenate %33, %28, %35 in 1 : vector<32x64xf32>, vector<32x64xf32>, vector<32x64xf32> -> vector<32x192xf32>
    %cst_16 = arith.constant dense<0.000000e+00> : vector<32x128xf32>
    %37 = tpu.matmul %36, %31, %cst_16 {dimension_numbers = #tpu.dot_dimension_numbers<[1], [0], [0], [1], [0, 0, 1, 1], [], []>} : vector<32x192xf32>, vector<192x128xf32>, vector<32x128xf32> -> vector<32x128xf32>
    %c768 = arith.constant 768 : index
    %c0_17 = arith.constant 0 : index
    %38 = vector.load %arg2[%c768, %c0_17] : memref<1000x128xf32, #tpu.memory_space<vmem>>, vector<128x128xf32>
    %c896 = arith.constant 896 : index
    %c0_18 = arith.constant 0 : index
    %39 = vector.load %arg2[%c896, %c0_18] : memref<1000x128xf32, #tpu.memory_space<vmem>>, vector<1x128xf32>
    %c904 = arith.constant 904 : index
    %c0_19 = arith.constant 0 : index
    %40 = vector.load %arg2[%c904, %c0_19] : memref<1000x128xf32, #tpu.memory_space<vmem>>, vector<1x128xf32>
    %cst_20 = arith.constant dense<0.000000e+00> : vector<128xf32>
    %41 = vector.multi_reduction <add>, %37, %cst_20 [0] : vector<32x128xf32> to vector<128xf32>
    %42 = vector.shape_cast %41 : vector<128xf32> to vector<1x128xf32>
    %cst_21 = arith.constant dense<0.000000e+00> : vector<1x128xf32>
    %43 = tpu.matmul %42, %38, %cst_21 {dimension_numbers = #tpu.dot_dimension_numbers<[1], [0], [0], [1], [0, 0, 1, 1], [], []>} : vector<1x128xf32>, vector<128x128xf32>, vector<1x128xf32> -> vector<1x128xf32>
    %cst_22 = arith.constant 0.001953125 : f32
    %44 = vector.broadcast %cst_22 : f32 to vector<1x128xf32>
    %45 = arith.mulf %43, %44 : vector<1x128xf32>
    %46 = vector.broadcast %45 : vector<1x128xf32> to vector<32x128xf32>
    %47 = arith.subf %37, %46 : vector<32x128xf32>
    %48 = arith.mulf %47, %47 : vector<32x128xf32>
    %cst_23 = arith.constant dense<0.000000e+00> : vector<128xf32>
    %49 = vector.multi_reduction <add>, %48, %cst_23 [0] : vector<32x128xf32> to vector<128xf32>
    %50 = vector.shape_cast %49 : vector<128xf32> to vector<1x128xf32>
    %cst_24 = arith.constant dense<0.000000e+00> : vector<1x128xf32>
    %51 = tpu.matmul %50, %38, %cst_24 {dimension_numbers = #tpu.dot_dimension_numbers<[1], [0], [0], [1], [0, 0, 1, 1], [], []>} : vector<1x128xf32>, vector<128x128xf32>, vector<1x128xf32> -> vector<1x128xf32>
    %cst_25 = arith.constant 0.001953125 : f32
    %52 = vector.broadcast %cst_25 : f32 to vector<1x128xf32>
    %53 = arith.mulf %51, %52 : vector<1x128xf32>
    %cst_26 = arith.constant 9.99999974E-6 : f32
    %54 = vector.broadcast %cst_26 : f32 to vector<1x128xf32>
    %55 = arith.addf %53, %54 : vector<1x128xf32>
    %56 = math.rsqrt %55 : vector<1x128xf32>
    %57 = arith.mulf %39, %56 : vector<1x128xf32>
    %58 = arith.mulf %45, %57 : vector<1x128xf32>
    %59 = arith.subf %40, %58 : vector<1x128xf32>
    %60 = vector.broadcast %57 : vector<1x128xf32> to vector<32x128xf32>
    %61 = arith.mulf %37, %60 : vector<32x128xf32>
    %62 = vector.broadcast %59 : vector<1x128xf32> to vector<32x128xf32>
    %63 = arith.addf %61, %62 : vector<32x128xf32>
    %cst_27 = arith.constant 0.000000e+00 : f32
    %64 = vector.broadcast %cst_27 : f32 to vector<32x128xf32>
    %65 = arith.maximumf %63, %64 : vector<32x128xf32>
    %c936 = arith.constant 936 : index
    %c0_28 = arith.constant 0 : index
    %66 = vector.load %arg2[%c936, %c0_28] : memref<1000x128xf32, #tpu.memory_space<vmem>>, vector<32x128xf32>
    %c968 = arith.constant 968 : index
    %c0_29 = arith.constant 0 : index
    %67 = vector.load %arg2[%c968, %c0_29] : memref<1000x128xf32, #tpu.memory_space<vmem>>, vector<32x128xf32>
    %c192 = arith.constant 192 : index
    %c0_30 = arith.constant 0 : index
    %68 = vector.load %arg2[%c192, %c0_30] : memref<1000x128xf32, #tpu.memory_space<vmem>>, vector<384x128xf32>
    %c1_i32_31 = arith.constant 1 : i32
    %69 = tpu.dynamic_rotate %65 by %c1_i32_31 dim 0 : vector<32x128xf32>, i32 -> vector<32x128xf32>
    %70 = arith.mulf %69, %66 : vector<32x128xf32>
    %c31_i32_32 = arith.constant 31 : i32
    %71 = tpu.dynamic_rotate %65 by %c31_i32_32 dim 0 : vector<32x128xf32>, i32 -> vector<32x128xf32>
    %72 = arith.mulf %71, %67 : vector<32x128xf32>
    %73 = tpu.concatenate %70, %65, %72 in 1 : vector<32x128xf32>, vector<32x128xf32>, vector<32x128xf32> -> vector<32x384xf32>
    %cst_33 = arith.constant dense<0.000000e+00> : vector<32x128xf32>
    %74 = tpu.matmul %73, %68, %cst_33 {dimension_numbers = #tpu.dot_dimension_numbers<[1], [0], [0], [1], [0, 0, 1, 1], [], []>} : vector<32x384xf32>, vector<384x128xf32>, vector<32x128xf32> -> vector<32x128xf32>
    %c928 = arith.constant 928 : index
    %c0_34 = arith.constant 0 : index
    %75 = vector.load %arg2[%c928, %c0_34] : memref<1000x128xf32, #tpu.memory_space<vmem>>, vector<1x128xf32>
    %76 = vector.broadcast %75 : vector<1x128xf32> to vector<32x128xf32>
    %77 = arith.addf %74, %76 : vector<32x128xf32>
    %c80_35 = arith.constant 80 : index
    %c0_36 = arith.constant 0 : index
    %78 = vector.load %arg1[%c80_35, %c0_36] : memref<144x64xf32, #tpu.memory_space<vmem>>, vector<32x64xf32>
    %c112_37 = arith.constant 112 : index
    %c0_38 = arith.constant 0 : index
    %79 = vector.load %arg1[%c112_37, %c0_38] : memref<144x64xf32, #tpu.memory_space<vmem>>, vector<32x64xf32>
    %c576 = arith.constant 576 : index
    %c0_39 = arith.constant 0 : index
    %80 = vector.load %arg2[%c576, %c0_39] : memref<1000x128xf32, #tpu.memory_space<vmem>>, vector<192x128xf32>
    %c1_i32_40 = arith.constant 1 : i32
    %81 = tpu.dynamic_rotate %0 by %c1_i32_40 dim 0 : vector<32x64xf32>, i32 -> vector<32x64xf32>
    %82 = arith.mulf %81, %78 : vector<32x64xf32>
    %c31_i32_41 = arith.constant 31 : i32
    %83 = tpu.dynamic_rotate %0 by %c31_i32_41 dim 0 : vector<32x64xf32>, i32 -> vector<32x64xf32>
    %84 = arith.mulf %83, %79 : vector<32x64xf32>
    %85 = tpu.concatenate %82, %0, %84 in 1 : vector<32x64xf32>, vector<32x64xf32>, vector<32x64xf32> -> vector<32x192xf32>
    %cst_42 = arith.constant dense<0.000000e+00> : vector<32x128xf32>
    %86 = tpu.matmul %85, %80, %cst_42 {dimension_numbers = #tpu.dot_dimension_numbers<[1], [0], [0], [1], [0, 0, 1, 1], [], []>} : vector<32x192xf32>, vector<192x128xf32>, vector<32x128xf32> -> vector<32x128xf32>
    %c768_43 = arith.constant 768 : index
    %c0_44 = arith.constant 0 : index
    %87 = vector.load %arg2[%c768_43, %c0_44] : memref<1000x128xf32, #tpu.memory_space<vmem>>, vector<128x128xf32>
    %c912 = arith.constant 912 : index
    %c0_45 = arith.constant 0 : index
    %88 = vector.load %arg2[%c912, %c0_45] : memref<1000x128xf32, #tpu.memory_space<vmem>>, vector<1x128xf32>
    %c920 = arith.constant 920 : index
    %c0_46 = arith.constant 0 : index
    %89 = vector.load %arg2[%c920, %c0_46] : memref<1000x128xf32, #tpu.memory_space<vmem>>, vector<1x128xf32>
    %cst_47 = arith.constant dense<0.000000e+00> : vector<128xf32>
    %90 = vector.multi_reduction <add>, %86, %cst_47 [0] : vector<32x128xf32> to vector<128xf32>
    %91 = vector.shape_cast %90 : vector<128xf32> to vector<1x128xf32>
    %cst_48 = arith.constant dense<0.000000e+00> : vector<1x128xf32>
    %92 = tpu.matmul %91, %87, %cst_48 {dimension_numbers = #tpu.dot_dimension_numbers<[1], [0], [0], [1], [0, 0, 1, 1], [], []>} : vector<1x128xf32>, vector<128x128xf32>, vector<1x128xf32> -> vector<1x128xf32>
    %cst_49 = arith.constant 0.001953125 : f32
    %93 = vector.broadcast %cst_49 : f32 to vector<1x128xf32>
    %94 = arith.mulf %92, %93 : vector<1x128xf32>
    %95 = vector.broadcast %94 : vector<1x128xf32> to vector<32x128xf32>
    %96 = arith.subf %86, %95 : vector<32x128xf32>
    %97 = arith.mulf %96, %96 : vector<32x128xf32>
    %cst_50 = arith.constant dense<0.000000e+00> : vector<128xf32>
    %98 = vector.multi_reduction <add>, %97, %cst_50 [0] : vector<32x128xf32> to vector<128xf32>
    %99 = vector.shape_cast %98 : vector<128xf32> to vector<1x128xf32>
    %cst_51 = arith.constant dense<0.000000e+00> : vector<1x128xf32>
    %100 = tpu.matmul %99, %87, %cst_51 {dimension_numbers = #tpu.dot_dimension_numbers<[1], [0], [0], [1], [0, 0, 1, 1], [], []>} : vector<1x128xf32>, vector<128x128xf32>, vector<1x128xf32> -> vector<1x128xf32>
    %cst_52 = arith.constant 0.001953125 : f32
    %101 = vector.broadcast %cst_52 : f32 to vector<1x128xf32>
    %102 = arith.mulf %100, %101 : vector<1x128xf32>
    %cst_53 = arith.constant 9.99999974E-6 : f32
    %103 = vector.broadcast %cst_53 : f32 to vector<1x128xf32>
    %104 = arith.addf %102, %103 : vector<1x128xf32>
    %105 = math.rsqrt %104 : vector<1x128xf32>
    %106 = arith.mulf %88, %105 : vector<1x128xf32>
    %107 = arith.mulf %94, %106 : vector<1x128xf32>
    %108 = arith.subf %89, %107 : vector<1x128xf32>
    %109 = vector.broadcast %106 : vector<1x128xf32> to vector<32x128xf32>
    %110 = arith.mulf %86, %109 : vector<32x128xf32>
    %111 = arith.addf %77, %110 : vector<32x128xf32>
    %112 = vector.broadcast %108 : vector<1x128xf32> to vector<32x128xf32>
    %113 = arith.addf %111, %112 : vector<32x128xf32>
    %c0_54 = arith.constant 0 : index
    %c0_55 = arith.constant 0 : index
    %114 = vector.load %arg3[%c0_54, %c0_55] : memref<32x128xf32, #tpu.memory_space<vmem>>, vector<32x128xf32>
    tpu.vector_store %arg3[%c0_54, %c0_55], %113 {strides = array<i32>} : memref<32x128xf32, #tpu.memory_space<vmem>>, vector<32x128xf32>,
    return
  }
}

</mosaic_0001>

<llo_original>
// kernel: forward.1
$region0: #{forward.1}
  #allocation0 [shape = 'u32[]', space=smem, size = 0x4, offset = 0x4, fixed_abs, tag = 'smem constant byte address 0x4 - core index']
  #allocation1 [shape = 'u32[72,128]{1,0:T(1,128)}', space=vmem, size = 0x9000, scoped, tag = 'internal scratch']
  %s0 = inlined_call_operand.vmem [shape: f32[32,64], index: 0, kind: input, shape index: {}]
  %s1 = inlined_call_operand.vmem [shape: f32[144,64], index: 1, kind: input, shape index: {}]
  %s2 = inlined_call_operand.hbm [shape: f32[1000,128], index: 2, kind: input, shape index: {}]
  %s3 = inlined_call_operand.vmem [shape: f32[32,128], index: 3, kind: output, shape index: {}]
  %s4 = sld [smem:[#allocation0]]
  $region26: #{forward.1} parent=0
    _
  %s6 = ssub.s32 1, %s4
  %s7 = scalar_select 0, %s6, %s4
  $region1: #{forward.1} parent=0
    #allocation2 [shape = 'u8[512000]{0}', space=vmem, size = 0x7d000, scoped, tag = 'input window, operand 2, single buffered']
    #allocation3 [shape = 's32[1]{0}', space=sflag, size = 0x4, scoped, tag = 'scoped memory for forward.1']
    %8 = vsyncpa [#allocation3], 0
    // Predicated region
    $region2: #{forward.1} parent=1 // pred_check
      _
    $region3: #{forward.1} parent=1 // pred_check_branch
      %10 = sbr.rel (0) target = $region5
    $region4: #{forward.1} parent=1 // pred_region
      _
    $region5: #{forward.1} parent=1 // pred_fallthru
      _
    // Predicated region
    $region6: #{forward.1} parent=1 // pred_check
      _
    $region7: #{forward.1} parent=1 // pred_check_branch
      %12 = sbr.rel (0) target = $region9
    $region8: #{forward.1} parent=1 // pred_region
      _
    $region9: #{forward.1} parent=1 // pred_fallthru
      _
    // Predicated region
    $region10: #{forward.1} parent=1 // pred_check
      _
    $region11: #{forward.1} parent=1 // pred_check_branch
      %14 = sbr.rel (0) target = $region13
    $region12: #{forward.1} parent=1 // pred_region
      %16 = vsyncadd [#allocation3], 0
      %s17 = sshll.u32 %s2, 4
      %s18 = int_to_ptr.hbm [resolvable:$true] %s17
      %s19 = sshll.u32 [#allocation2], 4
      %s20 = int_to_ptr.vmem [resolvable:$true] %s19
      %25 = dma.hbm_to_vmem [thread:$0]  %s18, 16000, %s20, [#allocation3], 128, 128, 8
    $region13: #{forward.1} parent=1 // pred_fallthru
      _
    // Predicated region
    $region14: #{forward.1} parent=1 // pred_check
      _
    $region15: #{forward.1} parent=1 // pred_check_branch
      %27 = sbr.rel (0) target = $region17
    $region16: #{forward.1} parent=1 // pred_region
      %29 = dma.done [#allocation3], 16000
    $region17: #{forward.1} parent=1 // pred_fallthru
      _
    %v30 = vld [vmem:[%s0] sm:$0xff]
    %v31 = vld [vmem:[%s0 + $0x8] sm:$0xff]
    %v32 = vld [vmem:[%s0 + $0x10] sm:$0xff]
    %v33 = vld [vmem:[%s0 + $0x18] sm:$0xff]
    %v34 = vld [vmem:[%s1] sm:$0xff]
    %v35 = vld [vmem:[%s1 + $0x8] sm:$0xff]
    %v36 = vld [vmem:[%s1 + $0x10] sm:$0xff]
    %v37 = vld [vmem:[%s1 + $0x18] sm:$0xff]
    %v38 = vld [vmem:[%s1 + $0x20] sm:$0xff]
    %v39 = vld [vmem:[%s1 + $0x28] sm:$0xff]
    %v40 = vld [vmem:[%s1 + $0x30] sm:$0xff]
    %v41 = vld [vmem:[%s1 + $0x38] sm:$0xff]
    %v42 = vld [vmem:[%s1 + $0x40] sm:$0x1]
    %v43 = vld [vmem:[%s1 + $0x48] sm:$0x1]
    %vm44 = vcmask 523264
    %v45 = vsel %vm44, %v30, 0.0
    %v46 = vsel %vm44, %v31, 0.0
    %v47 = vadd.f32 %v45, %v46
    %v48 = vsel %vm44, %v32, 0.0
    %v49 = vadd.f32 %v47, %v48
    %v50 = vsel %vm44, %v33, 0.0
    %v51 = vadd.f32 %v49, %v50
    %v52 = vrot.slane %v51, 4
    %v53 = vadd.f32 %v51, %v52
    %v54 = vrot.slane %v53, 2
    %v55 = vadd.f32 %v53, %v54
    %v56 = vrot.slane %v55, 1
    %v57 = vadd.f32 %v55, %v56
    %v59 = vsel %vm44, %v57, 0
    %61 = vmatpush.msra.mxu0 0.0
    %62 = vmatpush.msra.mxu0 0.0
    %63 = vmatpush.msra.mxu0 0.0
    %64 = vmatpush.msra.mxu0 0.0
    %65 = vmatpush.msra.mxu0 0.0
    %66 = vmatpush.msra.mxu0 0.0
    %67 = vmatpush.msra.mxu0 0.0
    %68 = vmatpush.msra.mxu0 0.0
    %69 = vmatpush.msra.mxu0 %v41
    %70 = vmatpush.msra.mxu0 %v40
    %71 = vmatpush.msra.mxu0 %v39
    %72 = vmatpush.msra.mxu0 %v38
    %73 = vmatpush.msra.mxu0 %v37
    %74 = vmatpush.msra.mxu0 %v36
    %75 = vmatpush.msra.mxu0 %v35
    %76 = vmatpush.msra.mxu0 %v34
    %77 = vmatmul.f32.gmra.mxu0 %v59
    %v78 = vpop.f32.mrf.mxu0
    %v79 = vadd.f32 0.0, %v78
    %80 = vdwg.mxu0
    %v81 = vmul.f32 %v79, 0.001953125
    %v82 = vperm.slane %v81, 0
    %v83 = vsub.f32 %v30, %v82
    %v84 = vsub.f32 %v31, %v82
    %v85 = vsub.f32 %v32, %v82
    %v86 = vsub.f32 %v33, %v82
    %v87 = vmul.f32 %v83, %v83
    %v88 = vmul.f32 %v84, %v84
    %v89 = vmul.f32 %v85, %v85
    %v90 = vmul.f32 %v86, %v86
    %v91 = vsel %vm44, %v87, 0.0
    %v92 = vsel %vm44, %v88, 0.0
    %v93 = vadd.f32 %v91, %v92
    %v94 = vsel %vm44, %v89, 0.0
    %v95 = vadd.f32 %v93, %v94
    %v96 = vsel %vm44, %v90, 0.0
    %v97 = vadd.f32 %v95, %v96
    %v98 = vrot.slane %v97, 4
    %v99 = vadd.f32 %v97, %v98
    %v100 = vrot.slane %v99, 2
    %v101 = vadd.f32 %v99, %v100
    %v102 = vrot.slane %v101, 1
    %v103 = vadd.f32 %v101, %v102
    %v105 = vsel %vm44, %v103, 0
    %107 = vmatpush.msra.mxu0 0.0
    %108 = vmatpush.msra.mxu0 0.0
    %109 = vmatpush.msra.mxu0 0.0
    %110 = vmatpush.msra.mxu0 0.0
    %111 = vmatpush.msra.mxu0 0.0
    %112 = vmatpush.msra.mxu0 0.0
    %113 = vmatpush.msra.mxu0 0.0
    %114 = vmatpush.msra.mxu0 0.0
    %115 = vmatpush.msra.mxu0 %v41
    %116 = vmatpush.msra.mxu0 %v40
    %117 = vmatpush.msra.mxu0 %v39
    %118 = vmatpush.msra.mxu0 %v38
    %119 = vmatpush.msra.mxu0 %v37
    %120 = vmatpush.msra.mxu0 %v36
    %121 = vmatpush.msra.mxu0 %v35
    %122 = vmatpush.msra.mxu0 %v34
    %123 = vmatmul.f32.gmra.mxu0 %v105
    %v124 = vpop.f32.mrf.mxu0
    %v125 = vadd.f32 0.0, %v124
    %126 = vdwg.mxu0
    %v127 = vmul.f32 %v125, 0.001953125
    %v128 = vadd.f32 %v127, 1e-05
    %v129 = vrsqrt.pop %v128
    %v130 = vmul.f32 %v129, %v128
    %v131 = vmul.f32 %v130, %v129
    %v132 = vmul.f32 0.5, %v131
    %v133 = vsub.f32 1.5, %v132
    %v134 = vmul.f32 %v129, %v133
    %vm135 = vweird.f32 %v128
    %vm136 = vweird.f32 %v129
    %vm137 = vmor %vm135, %vm136
    %v138 = vsel %vm137, %v129, %v134
    %v139 = vmul.f32 %v42, %v138
    %v140 = vmul.f32 %v81, %v139
    %v141 = vsub.f32 %v43, %v140
    %v142 = vperm.slane %v139, 0
    %v143 = vmul.f32 %v30, %v142
    %v144 = vmul.f32 %v31, %v142
    %v145 = vmul.f32 %v32, %v142
    %v146 = vmul.f32 %v33, %v142
    %v147 = vperm.slane %v141, 0
    %v148 = vadd.f32 %v143, %v147
    %v149 = vadd.f32 %v144, %v147
    %v150 = vadd.f32 %v145, %v147
    %v151 = vadd.f32 %v146, %v147
    %v152 = vmax.f32 %v148, 0.0
    %v153 = vmax.f32 %v149, 0.0
    %v154 = vmax.f32 %v150, 0.0
    %v155 = vmax.f32 %v151, 0.0
    %v156 = vld [vmem:[%s1 + $0x50] sm:$0xff]
    %v157 = vld [vmem:[%s1 + $0x58] sm:$0xff]
    %v158 = vld [vmem:[%s1 + $0x60] sm:$0xff]
    %v159 = vld [vmem:[%s1 + $0x68] sm:$0xff]
    %v160 = vld [vmem:[%s1 + $0x70] sm:$0xff]
    %v161 = vld [vmem:[%s1 + $0x78] sm:$0xff]
    %v162 = vld [vmem:[%s1 + $0x80] sm:$0xff]
    %v163 = vld [vmem:[%s1 + $0x88] sm:$0xff]
    %v164 = vld [vmem:[#allocation2] sm:$0xff]
    %v165 = vld [vmem:[#allocation2 + $0x8] sm:$0xff]
    %v166 = vld [vmem:[#allocation2 + $0x10] sm:$0xff]
    %v167 = vld [vmem:[#allocation2 + $0x18] sm:$0xff]
    %v168 = vld [vmem:[#allocation2 + $0x20] sm:$0xff]
    %v169 = vld [vmem:[#allocation2 + $0x28] sm:$0xff]
    %v170 = vld [vmem:[#allocation2 + $0x30] sm:$0xff]
    %v171 = vld [vmem:[#allocation2 + $0x38] sm:$0xff]
    %v172 = vld [vmem:[#allocation2 + $0x40] sm:$0xff]
    %v173 = vld [vmem:[#allocation2 + $0x48] sm:$0xff]
    %v174 = vld [vmem:[#allocation2 + $0x50] sm:$0xff]
    %v175 = vld [vmem:[#allocation2 + $0x58] sm:$0xff]
    %v176 = vld [vmem:[#allocation2 + $0x60] sm:$0xff]
    %v177 = vld [vmem:[#allocation2 + $0x68] sm:$0xff]
    %v178 = vld [vmem:[#allocation2 + $0x70] sm:$0xff]
    %v179 = vld [vmem:[#allocation2 + $0x78] sm:$0xff]
    %v180 = vld [vmem:[#allocation2 + $0x80] sm:$0xff]
    %v181 = vld [vmem:[#allocation2 + $0x88] sm:$0xff]
    %v182 = vld [vmem:[#allocation2 + $0x90] sm:$0xff]
    %v183 = vld [vmem:[#allocation2 + $0x98] sm:$0xff]
    %v184 = vld [vmem:[#allocation2 + $0xa0] sm:$0xff]
    %v185 = vld [vmem:[#allocation2 + $0xa8] sm:$0xff]
    %v186 = vld [vmem:[#allocation2 + $0xb0] sm:$0xff]
    %v187 = vld [vmem:[#allocation2 + $0xb8] sm:$0xff]
    %v188 = vrot.slane %v152, 7
    %v189 = vrot.slane %v153, 7
    %v190 = vrot.slane %v154, 7
    %v191 = vrot.slane %v155, 7
    %v192 = vlaneseq
    %v193 = vshrl.u32 %v192, 7
    %vm194 = vcmp.lt.s32.totalorder %v193, 1
    %v195 = vsel %vm194, %v190, %v191
    %v196 = vsel %vm194, %v189, %v190
    %v197 = vsel %vm194, %v188, %v189
    %v198 = vsel %vm194, %v191, %v188
    %v199 = vmul.f32 %v198, %v156
    %v200 = vmul.f32 %v197, %v157
    %v201 = vmul.f32 %v196, %v158
    %v202 = vmul.f32 %v195, %v159
    %v203 = vrot.slane %v152, 1
    %v204 = vrot.slane %v153, 1
    %v205 = vrot.slane %v154, 1
    %v206 = vrot.slane %v155, 1
    %vm207 = vcmp.lt.s32.totalorder %v193, 7
    %v208 = vsel %vm207, %v205, %v206
    %v209 = vsel %vm207, %v204, %v205
    %v210 = vsel %vm207, %v203, %v204
    %v211 = vsel %vm207, %v206, %v203
    %v212 = vmul.f32 %v210, %v160
    %v213 = vmul.f32 %v209, %v161
    %v214 = vmul.f32 %v208, %v162
    %v215 = vmul.f32 %v211, %v163
    %220 = vrot.lane.b32.xlu0 %v152, 64
    %v221 = vpop.permute.xlu0 %220
    %222 = vrot.lane.b32.xlu0 %v153, 64
    %v223 = vpop.permute.xlu0 %222
    %224 = vrot.lane.b32.xlu0 %v154, 64
    %v225 = vpop.permute.xlu0 %224
    %226 = vrot.lane.b32.xlu0 %v155, 64
    %v227 = vpop.permute.xlu0 %226
    %v232 = vsel %vm44, %v199, %v221
    %v233 = vsel %vm44, %v200, %v223
    %v234 = vsel %vm44, %v201, %v225
    %v235 = vsel %vm44, %v202, %v227
    %v237 = vsel %vm44, %v212, 0
    %v240 = vsel %vm44, %v213, 0
    %v243 = vsel %vm44, %v214, 0
    %v246 = vsel %vm44, %v215, 0
    %248 = vmatpush.msra.mxu0 %v179
    %249 = vmatpush.msra.mxu0 %v178
    %250 = vmatpush.msra.mxu0 %v177
    %251 = vmatpush.msra.mxu0 %v176
    %252 = vmatpush.msra.mxu0 %v175
    %253 = vmatpush.msra.mxu0 %v174
    %254 = vmatpush.msra.mxu0 %v173
    %255 = vmatpush.msra.mxu0 %v172
    %256 = vmatpush.msra.mxu0 %v171
    %257 = vmatpush.msra.mxu0 %v170
    %258 = vmatpush.msra.mxu0 %v169
    %259 = vmatpush.msra.mxu0 %v168
    %260 = vmatpush.msra.mxu0 %v167
    %261 = vmatpush.msra.mxu0 %v166
    %262 = vmatpush.msra.mxu0 %v165
    %263 = vmatpush.msra.mxu0 %v164
    %264 = vmatmul.f32.gmra.mxu0 %v232
    %v265 = vpop.f32.mrf.mxu0
    %v266 = vadd.f32 0.0, %v265
    %267 = vmatmul.f32.gmra.mxu0 %v233
    %v268 = vpop.f32.mrf.mxu0
    %v269 = vadd.f32 0.0, %v268
    %270 = vmatmul.f32.gmra.mxu0 %v234
    %v271 = vpop.f32.mrf.mxu0
    %v272 = vadd.f32 0.0, %v271
    %273 = vmatmul.f32.gmra.mxu0 %v235
    %v274 = vpop.f32.mrf.mxu0
    %v275 = vadd.f32 0.0, %v274
    %276 = vdwg.mxu0
    %277 = vmatpush.msra.mxu0 0.0
    %278 = vmatpush.msra.mxu0 0.0
    %279 = vmatpush.msra.mxu0 0.0
    %280 = vmatpush.msra.mxu0 0.0
    %281 = vmatpush.msra.mxu0 0.0
    %282 = vmatpush.msra.mxu0 0.0
    %283 = vmatpush.msra.mxu0 0.0
    %284 = vmatpush.msra.mxu0 0.0
    %285 = vmatpush.msra.mxu0 %v187
    %286 = vmatpush.msra.mxu0 %v186
    %287 = vmatpush.msra.mxu0 %v185
    %288 = vmatpush.msra.mxu0 %v184
    %289 = vmatpush.msra.mxu0 %v183
    %290 = vmatpush.msra.mxu0 %v182
    %291 = vmatpush.msra.mxu0 %v181
    %292 = vmatpush.msra.mxu0 %v180
    %293 = vmatmul.f32.gmra.mxu0 %v237
    %v294 = vpop.f32.mrf.mxu0
    %v295 = vadd.f32 %v266, %v294
    %296 = vmatmul.f32.gmra.mxu0 %v240
    %v297 = vpop.f32.mrf.mxu0
    %v298 = vadd.f32 %v269, %v297
    %299 = vmatmul.f32.gmra.mxu0 %v243
    %v300 = vpop.f32.mrf.mxu0
    %v301 = vadd.f32 %v272, %v300
    %302 = vmatmul.f32.gmra.mxu0 %v246
    %v303 = vpop.f32.mrf.mxu0
    %v304 = vadd.f32 %v275, %v303
    %305 = vdwg.mxu0
    %v306 = vld [vmem:[#allocation2 + $0x300] sm:$0xff]
    %v307 = vld [vmem:[#allocation2 + $0x308] sm:$0xff]
    %v308 = vld [vmem:[#allocation2 + $0x310] sm:$0xff]
    %v309 = vld [vmem:[#allocation2 + $0x318] sm:$0xff]
    %v310 = vld [vmem:[#allocation2 + $0x320] sm:$0xff]
    %v311 = vld [vmem:[#allocation2 + $0x328] sm:$0xff]
    %v312 = vld [vmem:[#allocation2 + $0x330] sm:$0xff]
    %v313 = vld [vmem:[#allocation2 + $0x338] sm:$0xff]
    %v314 = vld [vmem:[#allocation2 + $0x340] sm:$0xff]
    %v315 = vld [vmem:[#allocation2 + $0x348] sm:$0xff]
    %v316 = vld [vmem:[#allocation2 + $0x350] sm:$0xff]
    %v317 = vld [vmem:[#allocation2 + $0x358] sm:$0xff]
    %v318 = vld [vmem:[#allocation2 + $0x360] sm:$0xff]
    %v319 = vld [vmem:[#allocation2 + $0x368] sm:$0xff]
    %v320 = vld [vmem:[#allocation2 + $0x370] sm:$0xff]
    %v321 = vld [vmem:[#allocation2 + $0x378] sm:$0xff]
    %v322 = vld [vmem:[#allocation2 + $0x380] sm:$0x1]
    %v323 = vld [vmem:[#allocation2 + $0x388] sm:$0x1]
    %v324 = vadd.f32 %v295, %v298
    %v325 = vadd.f32 %v324, %v301
    %v326 = vadd.f32 %v325, %v304
    %v327 = vrot.slane %v326, 4
    %v328 = vadd.f32 %v326, %v327
    %v329 = vrot.slane %v328, 2
    %v330 = vadd.f32 %v328, %v329
    %v331 = vrot.slane %v330, 1
    %v332 = vadd.f32 %v330, %v331
    %333 = vmatpush.msra.mxu0 %v321
    %334 = vmatpush.msra.mxu0 %v320
    %335 = vmatpush.msra.mxu0 %v319
    %336 = vmatpush.msra.mxu0 %v318
    %337 = vmatpush.msra.mxu0 %v317
    %338 = vmatpush.msra.mxu0 %v316
    %339 = vmatpush.msra.mxu0 %v315
    %340 = vmatpush.msra.mxu0 %v314
    %341 = vmatpush.msra.mxu0 %v313
    %342 = vmatpush.msra.mxu0 %v312
    %343 = vmatpush.msra.mxu0 %v311
    %344 = vmatpush.msra.mxu0 %v310
    %345 = vmatpush.msra.mxu0 %v309
    %346 = vmatpush.msra.mxu0 %v308
    %347 = vmatpush.msra.mxu0 %v307
    %348 = vmatpush.msra.mxu0 %v306
    %349 = vmatmul.f32.gmra.mxu0 %v332
    %v350 = vpop.f32.mrf.mxu0
    %v351 = vadd.f32 0.0, %v350
    %352 = vdwg.mxu0
    %v353 = vmul.f32 %v351, 0.001953125
    %v354 = vperm.slane %v353, 0
    %v355 = vsub.f32 %v295, %v354
    %v356 = vsub.f32 %v298, %v354
    %v357 = vsub.f32 %v301, %v354
    %v358 = vsub.f32 %v304, %v354
    %v359 = vmul.f32 %v355, %v355
    %v360 = vmul.f32 %v356, %v356
    %v361 = vmul.f32 %v357, %v357
    %v362 = vmul.f32 %v358, %v358
    %v363 = vadd.f32 %v359, %v360
    %v364 = vadd.f32 %v363, %v361
    %v365 = vadd.f32 %v364, %v362
    %v366 = vrot.slane %v365, 4
    %v367 = vadd.f32 %v365, %v366
    %v368 = vrot.slane %v367, 2
    %v369 = vadd.f32 %v367, %v368
    %v370 = vrot.slane %v369, 1
    %v371 = vadd.f32 %v369, %v370
    %372 = vmatpush.msra.mxu0 %v321
    %373 = vmatpush.msra.mxu0 %v320
    %374 = vmatpush.msra.mxu0 %v319
    %375 = vmatpush.msra.mxu0 %v318
    %376 = vmatpush.msra.mxu0 %v317
    %377 = vmatpush.msra.mxu0 %v316
    %378 = vmatpush.msra.mxu0 %v315
    %379 = vmatpush.msra.mxu0 %v314
    %380 = vmatpush.msra.mxu0 %v313
    %381 = vmatpush.msra.mxu0 %v312
    %382 = vmatpush.msra.mxu0 %v311
    %383 = vmatpush.msra.mxu0 %v310
    %384 = vmatpush.msra.mxu0 %v309
    %385 = vmatpush.msra.mxu0 %v308
    %386 = vmatpush.msra.mxu0 %v307
    %387 = vmatpush.msra.mxu0 %v306
    %388 = vmatmul.f32.gmra.mxu0 %v371
    %v389 = vpop.f32.mrf.mxu0
    %v390 = vadd.f32 0.0, %v389
    %391 = vdwg.mxu0
    %v392 = vmul.f32 %v390, 0.001953125
    %v393 = vadd.f32 %v392, 1e-05
    %v394 = vrsqrt.pop %v393
    %v395 = vmul.f32 %v394, %v393
    %v396 = vmul.f32 %v395, %v394
    %v397 = vmul.f32 0.5, %v396
    %v398 = vsub.f32 1.5, %v397
    %v399 = vmul.f32 %v394, %v398
    %vm400 = vweird.f32 %v393
    %vm401 = vweird.f32 %v394
    %vm402 = vmor %vm400, %vm401
    %v403 = vsel %vm402, %v394, %v399
    %v404 = vmul.f32 %v322, %v403
    %v405 = vmul.f32 %v353, %v404
    %v406 = vsub.f32 %v323, %v405
    %v407 = vperm.slane %v404, 0
    %v408 = vmul.f32 %v295, %v407
    %v409 = vmul.f32 %v298, %v407
    %v410 = vmul.f32 %v301, %v407
    %v411 = vmul.f32 %v304, %v407
    %v412 = vperm.slane %v406, 0
    %v413 = vadd.f32 %v408, %v412
    %v414 = vadd.f32 %v409, %v412
    %v415 = vadd.f32 %v410, %v412
    %v416 = vadd.f32 %v411, %v412
    %v417 = vmax.f32 %v413, 0.0
    %v418 = vmax.f32 %v414, 0.0
    %v419 = vmax.f32 %v415, 0.0
    %v420 = vmax.f32 %v416, 0.0
    %v421 = vld [vmem:[#allocation2 + $0x3a8] sm:$0xff]
    %v422 = vld [vmem:[#allocation2 + $0x3b0] sm:$0xff]
    %v423 = vld [vmem:[#allocation2 + $0x3b8] sm:$0xff]
    %v424 = vld [vmem:[#allocation2 + $0x3c0] sm:$0xff]
    %v425 = vld [vmem:[#allocation2 + $0x3c8] sm:$0xff]
    %v426 = vld [vmem:[#allocation2 + $0x3d0] sm:$0xff]
    %v427 = vld [vmem:[#allocation2 + $0x3d8] sm:$0xff]
    %v428 = vld [vmem:[#allocation2 + $0x3e0] sm:$0xff]
    %v429 = vld [vmem:[#allocation2 + $0xc0] sm:$0xff]
    %v430 = vld [vmem:[#allocation2 + $0xc8] sm:$0xff]
    %v431 = vld [vmem:[#allocation2 + $0xd0] sm:$0xff]
    %v432 = vld [vmem:[#allocation2 + $0xd8] sm:$0xff]
    %v433 = vld [vmem:[#allocation2 + $0xe0] sm:$0xff]
    %v434 = vld [vmem:[#allocation2 + $0xe8] sm:$0xff]
    %v435 = vld [vmem:[#allocation2 + $0xf0] sm:$0xff]
    %v436 = vld [vmem:[#allocation2 + $0xf8] sm:$0xff]
    %v437 = vld [vmem:[#allocation2 + $0x100] sm:$0xff]
    %v438 = vld [vmem:[#allocation2 + $0x108] sm:$0xff]
    %v439 = vld [vmem:[#allocation2 + $0x110] sm:$0xff]
    %v440 = vld [vmem:[#allocation2 + $0x118] sm:$0xff]
    %v441 = vld [vmem:[#allocation2 + $0x120] sm:$0xff]
    %v442 = vld [vmem:[#allocation2 + $0x128] sm:$0xff]
    %v443 = vld [vmem:[#allocation2 + $0x130] sm:$0xff]
    %v444 = vld [vmem:[#allocation2 + $0x138] sm:$0xff]
    %v445 = vld [vmem:[#allocation2 + $0x140] sm:$0xff]
    %v446 = vld [vmem:[#allocation2 + $0x148] sm:$0xff]
    %v447 = vld [vmem:[#allocation2 + $0x150] sm:$0xff]
    %v448 = vld [vmem:[#allocation2 + $0x158] sm:$0xff]
    %v449 = vld [vmem:[#allocation2 + $0x160] sm:$0xff]
    %v450 = vld [vmem:[#allocation2 + $0x168] sm:$0xff]
    %v451 = vld [vmem:[#allocation2 + $0x170] sm:$0xff]
    %v452 = vld [vmem:[#allocation2 + $0x178] sm:$0xff]
    %v453 = vld [vmem:[#allocation2 + $0x180] sm:$0xff]
    %v454 = vld [vmem:[#allocation2 + $0x188] sm:$0xff]
    %v455 = vld [vmem:[#allocation2 + $0x190] sm:$0xff]
    %v456 = vld [vmem:[#allocation2 + $0x198] sm:$0xff]
    %v457 = vld [vmem:[#allocation2 + $0x1a0] sm:$0xff]
    %v458 = vld [vmem:[#allocation2 + $0x1a8] sm:$0xff]
    %v459 = vld [vmem:[#allocation2 + $0x1b0] sm:$0xff]
    %v460 = vld [vmem:[#allocation2 + $0x1b8] sm:$0xff]
    %v461 = vld [vmem:[#allocation2 + $0x1c0] sm:$0xff]
    %v462 = vld [vmem:[#allocation2 + $0x1c8] sm:$0xff]
    %v463 = vld [vmem:[#allocation2 + $0x1d0] sm:$0xff]
    %v464 = vld [vmem:[#allocation2 + $0x1d8] sm:$0xff]
    %v465 = vld [vmem:[#allocation2 + $0x1e0] sm:$0xff]
    %v466 = vld [vmem:[#allocation2 + $0x1e8] sm:$0xff]
    %v467 = vld [vmem:[#allocation2 + $0x1f0] sm:$0xff]
    %v468 = vld [vmem:[#allocation2 + $0x1f8] sm:$0xff]
    %v469 = vld [vmem:[#allocation2 + $0x200] sm:$0xff]
    %v470 = vld [vmem:[#allocation2 + $0x208] sm:$0xff]
    %v471 = vld [vmem:[#allocation2 + $0x210] sm:$0xff]
    %v472 = vld [vmem:[#allocation2 + $0x218] sm:$0xff]
    %v473 = vld [vmem:[#allocation2 + $0x220] sm:$0xff]
    %v474 = vld [vmem:[#allocation2 + $0x228] sm:$0xff]
    %v475 = vld [vmem:[#allocation2 + $0x230] sm:$0xff]
    %v476 = vld [vmem:[#allocation2 + $0x238] sm:$0xff]
    %v477 = vrot.slane %v417, 7
    %v478 = vrot.slane %v418, 7
    %v479 = vrot.slane %v419, 7
    %v480 = vrot.slane %v420, 7
    %v481 = vsel %vm194, %v479, %v480
    %v482 = vsel %vm194, %v478, %v479
    %v483 = vsel %vm194, %v477, %v478
    %v484 = vsel %vm194, %v480, %v477
    %v485 = vmul.f32 %v484, %v421
    %v486 = vmul.f32 %v483, %v422
    %v487 = vmul.f32 %v482, %v423
    %v488 = vmul.f32 %v481, %v424
    %v489 = vrot.slane %v417, 1
    %v490 = vrot.slane %v418, 1
    %v491 = vrot.slane %v419, 1
    %v492 = vrot.slane %v420, 1
    %v493 = vsel %vm207, %v491, %v492
    %v494 = vsel %vm207, %v490, %v491
    %v495 = vsel %vm207, %v489, %v490
    %v496 = vsel %vm207, %v492, %v489
    %v497 = vmul.f32 %v495, %v425
    %v498 = vmul.f32 %v494, %v426
    %v499 = vmul.f32 %v493, %v427
    %v500 = vmul.f32 %v496, %v428
    %v501 = vld [vmem:[#allocation2 + $0x3a0] sm:$0x1]
    %v502 = vperm.slane %v501, 0
    %503 = vmatpush.msra.mxu0 %v444
    %504 = vmatpush.msra.mxu0 %v443
    %505 = vmatpush.msra.mxu0 %v442
    %506 = vmatpush.msra.mxu0 %v441
    %507 = vmatpush.msra.mxu0 %v440
    %508 = vmatpush.msra.mxu0 %v439
    %509 = vmatpush.msra.mxu0 %v438
    %510 = vmatpush.msra.mxu0 %v437
    %511 = vmatpush.msra.mxu0 %v436
    %512 = vmatpush.msra.mxu0 %v435
    %513 = vmatpush.msra.mxu0 %v434
    %514 = vmatpush.msra.mxu0 %v433
    %515 = vmatpush.msra.mxu0 %v432
    %516 = vmatpush.msra.mxu0 %v431
    %517 = vmatpush.msra.mxu0 %v430
    %518 = vmatpush.msra.mxu0 %v429
    %519 = vmatmul.f32.gmra.mxu0 %v485
    %v520 = vpop.f32.mrf.mxu0
    %v521 = vadd.f32 %v502, %v520
    %522 = vmatmul.f32.gmra.mxu0 %v486
    %v523 = vpop.f32.mrf.mxu0
    %v524 = vadd.f32 %v502, %v523
    %525 = vmatmul.f32.gmra.mxu0 %v487
    %v526 = vpop.f32.mrf.mxu0
    %v527 = vadd.f32 %v502, %v526
    %528 = vmatmul.f32.gmra.mxu0 %v488
    %v529 = vpop.f32.mrf.mxu0
    %v530 = vadd.f32 %v502, %v529
    %531 = vdwg.mxu0
    %532 = vmatpush.msra.mxu0 %v460
    %533 = vmatpush.msra.mxu0 %v459
    %534 = vmatpush.msra.mxu0 %v458
    %535 = vmatpush.msra.mxu0 %v457
    %536 = vmatpush.msra.mxu0 %v456
    %537 = vmatpush.msra.mxu0 %v455
    %538 = vmatpush.msra.mxu0 %v454
    %539 = vmatpush.msra.mxu0 %v453
    %540 = vmatpush.msra.mxu0 %v452
    %541 = vmatpush.msra.mxu0 %v451
    %542 = vmatpush.msra.mxu0 %v450
    %543 = vmatpush.msra.mxu0 %v449
    %544 = vmatpush.msra.mxu0 %v448
    %545 = vmatpush.msra.mxu0 %v447
    %546 = vmatpush.msra.mxu0 %v446
    %547 = vmatpush.msra.mxu0 %v445
    %548 = vmatmul.f32.gmra.mxu0 %v417
    %v549 = vpop.f32.mrf.mxu0
    %v550 = vadd.f32 %v521, %v549
    %551 = vmatmul.f32.gmra.mxu0 %v418
    %v552 = vpop.f32.mrf.mxu0
    %v553 = vadd.f32 %v524, %v552
    %554 = vmatmul.f32.gmra.mxu0 %v419
    %v555 = vpop.f32.mrf.mxu0
    %v556 = vadd.f32 %v527, %v555
    %557 = vmatmul.f32.gmra.mxu0 %v420
    %v558 = vpop.f32.mrf.mxu0
    %v559 = vadd.f32 %v530, %v558
    %560 = vdwg.mxu0
    %561 = vmatpush.msra.mxu0 %v476
    %562 = vmatpush.msra.mxu0 %v475
    %563 = vmatpush.msra.mxu0 %v474
    %564 = vmatpush.msra.mxu0 %v473
    %565 = vmatpush.msra.mxu0 %v472
    %566 = vmatpush.msra.mxu0 %v471
    %567 = vmatpush.msra.mxu0 %v470
    %568 = vmatpush.msra.mxu0 %v469
    %569 = vmatpush.msra.mxu0 %v468
    %570 = vmatpush.msra.mxu0 %v467
    %571 = vmatpush.msra.mxu0 %v466
    %572 = vmatpush.msra.mxu0 %v465
    %573 = vmatpush.msra.mxu0 %v464
    %574 = vmatpush.msra.mxu0 %v463
    %575 = vmatpush.msra.mxu0 %v462
    %576 = vmatpush.msra.mxu0 %v461
    %577 = vmatmul.f32.gmra.mxu0 %v497
    %v578 = vpop.f32.mrf.mxu0
    %v579 = vadd.f32 %v550, %v578
    %580 = vmatmul.f32.gmra.mxu0 %v498
    %v581 = vpop.f32.mrf.mxu0
    %v582 = vadd.f32 %v553, %v581
    %583 = vmatmul.f32.gmra.mxu0 %v499
    %v584 = vpop.f32.mrf.mxu0
    %v585 = vadd.f32 %v556, %v584
    %586 = vmatmul.f32.gmra.mxu0 %v500
    %v587 = vpop.f32.mrf.mxu0
    %v588 = vadd.f32 %v559, %v587
    %589 = vdwg.mxu0
    %v590 = vld [vmem:[#allocation2 + $0x240] sm:$0xff]
    %v591 = vld [vmem:[#allocation2 + $0x248] sm:$0xff]
    %v592 = vld [vmem:[#allocation2 + $0x250] sm:$0xff]
    %v593 = vld [vmem:[#allocation2 + $0x258] sm:$0xff]
    %v594 = vld [vmem:[#allocation2 + $0x260] sm:$0xff]
    %v595 = vld [vmem:[#allocation2 + $0x268] sm:$0xff]
    %v596 = vld [vmem:[#allocation2 + $0x270] sm:$0xff]
    %v597 = vld [vmem:[#allocation2 + $0x278] sm:$0xff]
    %v598 = vld [vmem:[#allocation2 + $0x280] sm:$0xff]
    %v599 = vld [vmem:[#allocation2 + $0x288] sm:$0xff]
    %v600 = vld [vmem:[#allocation2 + $0x290] sm:$0xff]
    %v601 = vld [vmem:[#allocation2 + $0x298] sm:$0xff]
    %v602 = vld [vmem:[#allocation2 + $0x2a0] sm:$0xff]
    %v603 = vld [vmem:[#allocation2 + $0x2a8] sm:$0xff]
    %v604 = vld [vmem:[#allocation2 + $0x2b0] sm:$0xff]
    %v605 = vld [vmem:[#allocation2 + $0x2b8] sm:$0xff]
    %v606 = vld [vmem:[#allocation2 + $0x2c0] sm:$0xff]
    %v607 = vld [vmem:[#allocation2 + $0x2c8] sm:$0xff]
    %v608 = vld [vmem:[#allocation2 + $0x2d0] sm:$0xff]
    %v609 = vld [vmem:[#allocation2 + $0x2d8] sm:$0xff]
    %v610 = vld [vmem:[#allocation2 + $0x2e0] sm:$0xff]
    %v611 = vld [vmem:[#allocation2 + $0x2e8] sm:$0xff]
    %v612 = vld [vmem:[#allocation2 + $0x2f0] sm:$0xff]
    %v613 = vld [vmem:[#allocation2 + $0x2f8] sm:$0xff]
    %v614 = vrot.slane %v30, 7
    %v615 = vrot.slane %v31, 7
    %v616 = vrot.slane %v32, 7
    %v617 = vrot.slane %v33, 7
    %v618 = vsel %vm194, %v616, %v617
    %v619 = vsel %vm194, %v615, %v616
    %v620 = vsel %vm194, %v614, %v615
    %v621 = vsel %vm194, %v617, %v614
    %v622 = vmul.f32 %v621, %v156
    %v623 = vmul.f32 %v620, %v157
    %v624 = vmul.f32 %v619, %v158
    %v625 = vmul.f32 %v618, %v159
    %v626 = vrot.slane %v30, 1
    %v627 = vrot.slane %v31, 1
    %v628 = vrot.slane %v32, 1
    %v629 = vrot.slane %v33, 1
    %v630 = vsel %vm207, %v628, %v629
    %v631 = vsel %vm207, %v627, %v628
    %v632 = vsel %vm207, %v626, %v627
    %v633 = vsel %vm207, %v629, %v626
    %v634 = vmul.f32 %v632, %v160
    %v635 = vmul.f32 %v631, %v161
    %v636 = vmul.f32 %v630, %v162
    %v637 = vmul.f32 %v633, %v163
    %642 = vrot.lane.b32.xlu0 %v30, 64
    %v643 = vpop.permute.xlu0 %642
    %644 = vrot.lane.b32.xlu0 %v31, 64
    %v645 = vpop.permute.xlu0 %644
    %646 = vrot.lane.b32.xlu0 %v32, 64
    %v647 = vpop.permute.xlu0 %646
    %648 = vrot.lane.b32.xlu0 %v33, 64
    %v649 = vpop.permute.xlu0 %648
    %v654 = vsel %vm44, %v622, %v643
    %v655 = vsel %vm44, %v623, %v645
    %v656 = vsel %vm44, %v624, %v647
    %v657 = vsel %vm44, %v625, %v649
    %v659 = vsel %vm44, %v634, 0
    %v662 = vsel %vm44, %v635, 0
    %v665 = vsel %vm44, %v636, 0
    %v668 = vsel %vm44, %v637, 0
    %670 = vmatpush.msra.mxu0 %v605
    %671 = vmatpush.msra.mxu0 %v604
    %672 = vmatpush.msra.mxu0 %v603
    %673 = vmatpush.msra.mxu0 %v602
    %674 = vmatpush.msra.mxu0 %v601
    %675 = vmatpush.msra.mxu0 %v600
    %676 = vmatpush.msra.mxu0 %v599
    %677 = vmatpush.msra.mxu0 %v598
    %678 = vmatpush.msra.mxu0 %v597
    %679 = vmatpush.msra.mxu0 %v596
    %680 = vmatpush.msra.mxu0 %v595
    %681 = vmatpush.msra.mxu0 %v594
    %682 = vmatpush.msra.mxu0 %v593
    %683 = vmatpush.msra.mxu0 %v592
    %684 = vmatpush.msra.mxu0 %v591
    %685 = vmatpush.msra.mxu0 %v590
    %686 = vmatmul.f32.gmra.mxu0 %v654
    %v687 = vpop.f32.mrf.mxu0
    %v688 = vadd.f32 0.0, %v687
    %689 = vmatmul.f32.gmra.mxu0 %v655
    %v690 = vpop.f32.mrf.mxu0
    %v691 = vadd.f32 0.0, %v690
    %692 = vmatmul.f32.gmra.mxu0 %v656
    %v693 = vpop.f32.mrf.mxu0
    %v694 = vadd.f32 0.0, %v693
    %695 = vmatmul.f32.gmra.mxu0 %v657
    %v696 = vpop.f32.mrf.mxu0
    %v697 = vadd.f32 0.0, %v696
    %698 = vdwg.mxu0
    %699 = vmatpush.msra.mxu0 0.0
    %700 = vmatpush.msra.mxu0 0.0
    %701 = vmatpush.msra.mxu0 0.0
    %702 = vmatpush.msra.mxu0 0.0
    %703 = vmatpush.msra.mxu0 0.0
    %704 = vmatpush.msra.mxu0 0.0
    %705 = vmatpush.msra.mxu0 0.0
    %706 = vmatpush.msra.mxu0 0.0
    %707 = vmatpush.msra.mxu0 %v613
    %708 = vmatpush.msra.mxu0 %v612
    %709 = vmatpush.msra.mxu0 %v611
    %710 = vmatpush.msra.mxu0 %v610
    %711 = vmatpush.msra.mxu0 %v609
    %712 = vmatpush.msra.mxu0 %v608
    %713 = vmatpush.msra.mxu0 %v607
    %714 = vmatpush.msra.mxu0 %v606
    %715 = vmatmul.f32.gmra.mxu0 %v659
    %v716 = vpop.f32.mrf.mxu0
    %v717 = vadd.f32 %v688, %v716
    %718 = vmatmul.f32.gmra.mxu0 %v662
    %v719 = vpop.f32.mrf.mxu0
    %v720 = vadd.f32 %v691, %v719
    %721 = vmatmul.f32.gmra.mxu0 %v665
    %v722 = vpop.f32.mrf.mxu0
    %v723 = vadd.f32 %v694, %v722
    %724 = vmatmul.f32.gmra.mxu0 %v668
    %v725 = vpop.f32.mrf.mxu0
    %v726 = vadd.f32 %v697, %v725
    %727 = vdwg.mxu0
    %v728 = vld [vmem:[#allocation2 + $0x390] sm:$0x1]
    %v729 = vld [vmem:[#allocation2 + $0x398] sm:$0x1]
    %v730 = vadd.f32 %v717, %v720
    %v731 = vadd.f32 %v730, %v723
    %v732 = vadd.f32 %v731, %v726
    %v733 = vrot.slane %v732, 4
    %v734 = vadd.f32 %v732, %v733
    %v735 = vrot.slane %v734, 2
    %v736 = vadd.f32 %v734, %v735
    %v737 = vrot.slane %v736, 1
    %v738 = vadd.f32 %v736, %v737
    %739 = vmatpush.msra.mxu0 %v321
    %740 = vmatpush.msra.mxu0 %v320
    %741 = vmatpush.msra.mxu0 %v319
    %742 = vmatpush.msra.mxu0 %v318
    %743 = vmatpush.msra.mxu0 %v317
    %744 = vmatpush.msra.mxu0 %v316
    %745 = vmatpush.msra.mxu0 %v315
    %746 = vmatpush.msra.mxu0 %v314
    %747 = vmatpush.msra.mxu0 %v313
    %748 = vmatpush.msra.mxu0 %v312
    %749 = vmatpush.msra.mxu0 %v311
    %750 = vmatpush.msra.mxu0 %v310
    %751 = vmatpush.msra.mxu0 %v309
    %752 = vmatpush.msra.mxu0 %v308
    %753 = vmatpush.msra.mxu0 %v307
    %754 = vmatpush.msra.mxu0 %v306
    %755 = vmatmul.f32.gmra.mxu0 %v738
    %v756 = vpop.f32.mrf.mxu0
    %v757 = vadd.f32 0.0, %v756
    %758 = vdwg.mxu0
    %v759 = vmul.f32 %v757, 0.001953125
    %v760 = vperm.slane %v759, 0
    %v761 = vsub.f32 %v717, %v760
    %v762 = vsub.f32 %v720, %v760
    %v763 = vsub.f32 %v723, %v760
    %v764 = vsub.f32 %v726, %v760
    %v765 = vmul.f32 %v761, %v761
    %v766 = vmul.f32 %v762, %v762
    %v767 = vmul.f32 %v763, %v763
    %v768 = vmul.f32 %v764, %v764
    %v769 = vadd.f32 %v765, %v766
    %v770 = vadd.f32 %v769, %v767
    %v771 = vadd.f32 %v770, %v768
    %v772 = vrot.slane %v771, 4
    %v773 = vadd.f32 %v771, %v772
    %v774 = vrot.slane %v773, 2
    %v775 = vadd.f32 %v773, %v774
    %v776 = vrot.slane %v775, 1
    %v777 = vadd.f32 %v775, %v776
    %778 = vmatpush.msra.mxu0 %v321
    %779 = vmatpush.msra.mxu0 %v320
    %780 = vmatpush.msra.mxu0 %v319
    %781 = vmatpush.msra.mxu0 %v318
    %782 = vmatpush.msra.mxu0 %v317
    %783 = vmatpush.msra.mxu0 %v316
    %784 = vmatpush.msra.mxu0 %v315
    %785 = vmatpush.msra.mxu0 %v314
    %786 = vmatpush.msra.mxu0 %v313
    %787 = vmatpush.msra.mxu0 %v312
    %788 = vmatpush.msra.mxu0 %v311
    %789 = vmatpush.msra.mxu0 %v310
    %790 = vmatpush.msra.mxu0 %v309
    %791 = vmatpush.msra.mxu0 %v308
    %792 = vmatpush.msra.mxu0 %v307
    %793 = vmatpush.msra.mxu0 %v306
    %794 = vmatmul.f32.gmra.mxu0 %v777
    %v795 = vpop.f32.mrf.mxu0
    %v796 = vadd.f32 0.0, %v795
    %797 = vdwg.mxu0
    %v798 = vmul.f32 %v796, 0.001953125
    %v799 = vadd.f32 %v798, 1e-05
    %v800 = vrsqrt.pop %v799
    %v801 = vmul.f32 %v800, %v799
    %v802 = vmul.f32 %v801, %v800
    %v803 = vmul.f32 0.5, %v802
    %v804 = vsub.f32 1.5, %v803
    %v805 = vmul.f32 %v800, %v804
    %vm806 = vweird.f32 %v799
    %vm807 = vweird.f32 %v800
    %vm808 = vmor %vm806, %vm807
    %v809 = vsel %vm808, %v800, %v805
    %v810 = vmul.f32 %v728, %v809
    %v811 = vmul.f32 %v759, %v810
    %v812 = vsub.f32 %v729, %v811
    %v813 = vperm.slane %v810, 0
    %v814 = vmul.f32 %v717, %v813
    %v815 = vmul.f32 %v720, %v813
    %v816 = vmul.f32 %v723, %v813
    %v817 = vmul.f32 %v726, %v813
    %v818 = vadd.f32 %v579, %v814
    %v819 = vadd.f32 %v582, %v815
    %v820 = vadd.f32 %v585, %v816
    %v821 = vadd.f32 %v588, %v817
    %v822 = vperm.slane %v812, 0
    %v823 = vadd.f32 %v818, %v822
    %v824 = vadd.f32 %v819, %v822
    %v825 = vadd.f32 %v820, %v822
    %v826 = vadd.f32 %v821, %v822
    %827 = vst [vmem:[%s3] sm:$0xff] %v823
    %828 = vst [vmem:[%s3 + $0x8] sm:$0xff] %v824
    %829 = vst [vmem:[%s3 + $0x10] sm:$0xff] %v825
    %830 = vst [vmem:[%s3 + $0x18] sm:$0xff] %v826
    // Predicated region
    $region18: #{forward.1} parent=1 // pred_check
      _
    $region19: #{forward.1} parent=1 // pred_check_branch
      %832 = sbr.rel (0) target = $region21
    $region20: #{forward.1} parent=1 // pred_region
      _
    $region21: #{forward.1} parent=1 // pred_fallthru
      _
    // Predicated region
    $region22: #{forward.1} parent=1 // pred_check
      _
    $region23: #{forward.1} parent=1 // pred_check_branch
      %834 = sbr.rel (0) target = $region25
    $region24: #{forward.1} parent=1 // pred_region
      _
    $region25: #{forward.1} parent=1 // pred_fallthru
      _
    %835 = vsyncpa [#allocation3], 1

</llo_original>
